<compile_context>
chip_gen: v5e
topology: v5e:2x2
jax: 0.10.0
libtpu: 0.0.40
codegen_flags: <defaults>
</compile_context>

<pallas_src>
import jax
import jax.numpy as jnp
from jax.experimental import pallas as pl
from jax.experimental.pallas import tpu as pltpu


def _round_up(x, m):
    return (x + m - 1) // m * m


def time_embedding_kernel(t_ref, freq_ref, phase_ref, w1_ref, b1_ref,
                          w2_ref, b2_ref, out_ref, emb_scr):
    """One grid step handles one tile of the hidden dimension.

    t_ref    : (B, 1)      f32 timesteps
    freq_ref : (1, D)      f32 per-column frequency (precomputed)
    phase_ref: (1, D)      f32 per-column phase (0 for sin half, pi/2 for cos)
    w1_ref   : (1, D, th)  bf16 tile-contiguous column tile of W1 (in, out)
    b1_ref   : (1, th)     f32 tile of the first bias
    w2_ref   : (th, D)     bf16 row tile of W2 (in, out)
    b2_ref   : (1, D)      f32 second bias (used only at k == 0)
    out_ref  : (B, D)      f32 resident output / accumulator
    emb_scr  : (B, D)      f32 VMEM scratch holding the sinusoidal embedding
    """
    k = pl.program_id(0)

    @pl.when(k == 0)
    def _():
        # sin(t * freq + phase) reproduces cat(sin(t*e), cos(t*e)) in one shot.
        emb_scr[...] = jnp.sin(t_ref[...] * freq_ref[...] + phase_ref[...])
        # Initialize the accumulator with the second bias.
        out_ref[...] = jnp.broadcast_to(b2_ref[...], out_ref.shape)

    # bf16 weights promoted to f32 at the MXU boundary; activations stay f32.
    # (HBM savings come from the halved *weight* stream; with M = B ~ 8 the
    # kernel is weight-bandwidth bound, so MXU dtype/compute is irrelevant.)
    w1 = w1_ref[0].astype(jnp.float32)                       # (D, th)
    h = jnp.dot(emb_scr[...], w1,
                preferred_element_type=jnp.float32) + b1_ref[...]
    h = h * jax.nn.sigmoid(h)                                # SiLU
    out_ref[...] += jnp.dot(h, w2_ref[...].astype(jnp.float32),
                            preferred_element_type=jnp.float32)


def _vmem_cap_bytes():
    """Generation-aware scoped-VMEM cap (headroom under physical VMEM)."""
    try:
        phys = pltpu.get_tpu_info().vmem_capacity_bytes
    except Exception:
        phys = 64 << 20          # be conservative (v7x-class: 64 MiB per TC)
    if phys <= (80 << 20):
        return 40 << 20          # v7x-class
    return 96 << 20              # v5e / v6e: 128 MiB physical


def _vmem_footprint(dim_p, b_p, th):
    """Rough resident-VMEM bytes incl. Pallas's default double-buffering."""
    wbytes = 2  # bfloat16 weights
    return (
        2 * (dim_p * th + th * dim_p) * wbytes   # W1 + W2 tiles, double-buffered
        + 2 * (th + dim_p) * 4                   # b1 tile + b2, double-buffered
        + 2 * (b_p + 2 * dim_p) * 4              # t, freq, phase
        + 2 * b_p * dim_p * 4                    # resident output
        + b_p * dim_p * 4                        # emb scratch
    )


def _pick_hidden_tile(dim_p, b_p, cap_bytes):
    """Largest th (divisor of dim_p, multiple of 128, including dim_p itself)
    whose pipelined footprint fits the budget -> fewer, bigger grid steps."""
    cands = [128 * d for d in range(dim_p // 128, 0, -1)
             if dim_p % (128 * d) == 0]
    for th in cands:
        if _vmem_footprint(dim_p, b_p, th) <= int(cap_bytes * 0.8):
            return th
    return cands[-1]  # 128; the cap-sized vmem limit decides feasibility


def time_embedding(t, w1, b1, w2, b2):
    """t: (B,) f32 timesteps; w1/w2: (dim, dim) (in,out); b1/b2: (dim,).
    Returns (B, dim) f32 embedding."""
    B = int(t.shape[0])
    dim = int(w1.shape[0])
    half = dim // 2

    # Lane/sublane-friendly padded problem (lane-dense unmasked stores).
    Bp = _round_up(max(B, 1), 8)
    dimP = _round_up(dim, 128)

    cap = _vmem_cap_bytes()
    th = _pick_hidden_tile(dimP, Bp, cap)
    n_k = dimP // th

    # ---- constant / weight prep (in a real model do this once at init) ----
    # TODO(synk): hoist the pad / bf16 cast / tile re-layout to parameter init
    # so it is not repeated per call.
    t2d = jnp.zeros((Bp, 1), jnp.float32).at[:B, 0].set(t.astype(jnp.float32))

    #   j <  half : emb[:, j] = sin(t * exp(-log(1e4)/(half-1) * j))
    #   j >= half : emb[:, j] = cos(...) = sin(... + pi/2)
    # padded columns (j >= dim): freq = phase = 0 (zero weights kill them).
    denom = jnp.float32(max(half - 1, 1))          # guard dim == 2
    log_scale = jnp.log(jnp.float32(10000.0)) / denom
    col = jnp.arange(dimP, dtype=jnp.float32)
    freq = jnp.where(
        col < dim,
        jnp.exp(-log_scale * jnp.where(col < half, col, col - half)),
        0.0).reshape(1, dimP).astype(jnp.float32)
    phase = jnp.where((col >= half) & (col < dim), jnp.pi / 2.0, 0.0)
    phase = phase.reshape(1, dimP).astype(jnp.float32)

    def pad2(w):
        return jnp.zeros((dimP, dimP), jnp.float32).at[:dim, :dim].set(
            w.astype(jnp.float32))

    w1p = pad2(w1).astype(jnp.bfloat16)
    w2p = pad2(w2).astype(jnp.bfloat16)
    # Tile-contiguous W1: (n_k, dimP, th) -> one large linear DMA per step.
    w1t = w1p.reshape(dimP, n_k, th).transpose(1, 0, 2)
    b1p = jnp.zeros((1, dimP), jnp.float32).at[0, :dim].set(b1.astype(jnp.float32))
    b2p = jnp.zeros((1, dimP), jnp.float32).at[0, :dim].set(b2.astype(jnp.float32))

    # ---- VMEM limit & cost hint -------------------------------------------
    footprint = _vmem_footprint(dimP, Bp, th)
    vmem_limit = int(min(cap, max(16 << 20, int(footprint * 1.5))))

    weight_bytes = 2 * dimP * dimP * 2                      # bf16 W1 + W2
    io_bytes = (Bp + 3 * dimP + 2 * dimP + Bp * dimP) * 4   # t/freq/phase/b/out
    cost = pl.CostEstimate(
        flops=4 * Bp * dimP * dimP,            # two (Bp,dimP)x(dimP,.) matmuls
        transcendentals=2 * Bp * dimP,         # sin + sigmoid
        bytes_accessed=weight_bytes + io_bytes,
    )

    grid_spec = pltpu.PrefetchScalarGridSpec(
        num_scalar_prefetch=0,
        grid=(n_k,),
        in_specs=[
            pl.BlockSpec((Bp, 1), lambda k: (0, 0)),            # t
            pl.BlockSpec((1, dimP), lambda k: (0, 0)),          # freq
            pl.BlockSpec((1, dimP), lambda k: (0, 0)),          # phase
            pl.BlockSpec((1, dimP, th), lambda k: (k, 0, 0)),   # W1 tile
            pl.BlockSpec((1, th), lambda k: (0, k)),            # b1 tile
            pl.BlockSpec((th, dimP), lambda k: (k, 0)),         # W2 row tile
            pl.BlockSpec((1, dimP), lambda k: (0, 0)),          # b2
        ],
        out_specs=pl.BlockSpec((Bp, dimP), lambda k: (0, 0)),   # resident acc
        scratch_shapes=[pltpu.VMEM((Bp, dimP), jnp.float32)],   # emb scratch
    )

    out = pl.pallas_call(
        time_embedding_kernel,
        out_shape=jax.ShapeDtypeStruct((Bp, dimP), jnp.float32),
        grid_spec=grid_spec,
        compiler_params=pltpu.CompilerParams(
            dimension_semantics=("arbitrary",),   # hidden-dim reduction axis
            vmem_limit_bytes=vmem_limit,
        ),
        cost_estimate=cost,
    )(t2d, freq, phase, w1t, b1p, w2p, b2p)

    return out[:B, :dim]


def time_embedding_ref(t, w1, b1, w2, b2, weights_dtype=jnp.float32):
    """Pure-JAX reference mirroring the PyTorch forward.  `weights_dtype`
    lets us compare apples-to-apples with the kernel's bf16 weight storage."""
    dim = w1.shape[0]
    half = dim // 2
    emb_scale = jnp.exp(jnp.arange(half, dtype=jnp.float32)
                        * -(jnp.log(10000.0) / (half - 1)))
    emb = t[:, None] * emb_scale[None, :]
    emb = jnp.concatenate([jnp.sin(emb), jnp.cos(emb)], axis=-1)
    w1r = w1.astype(weights_dtype).astype(jnp.float32)
    w2r = w2.astype(weights_dtype).astype(jnp.float32)
    h = emb @ w1r + b1
    h = h * jax.nn.sigmoid(h)
    return h @ w2r + b2


if __name__ == "__main__":
    def run_case(B, dim, key):
        k_t, k_w1, k_b1, k_w2, k_b2 = jax.random.split(key, 5)
        t = jax.random.uniform(k_t, (B,), jnp.float32, 0.0, 100.0)
        scale = 1.0 / jnp.sqrt(jnp.float32(dim))
        w1 = jax.random.uniform(k_w1, (dim, dim), jnp.float32, -scale, scale)
        b1 = jax.random.uniform(k_b1, (dim,), jnp.float32, -scale, scale)
        w2 = jax.random.uniform(k_w2, (dim, dim), jnp.float32, -scale, scale)
        b2 = jax.random.uniform(k_b2, (dim,), jnp.float32, -scale, scale)

        out = jax.block_until_ready(time_embedding(t, w1, b1, w2, b2))
        assert out.shape == (B, dim)
        # Tight check vs a reference that uses the same bf16-rounded weights.
        ref_bf16 = time_embedding_ref(t, w1, b1, w2, b2,
                                      weights_dtype=jnp.bfloat16)
        assert jnp.allclose(out, ref_bf16, atol=1e-4, rtol=1e-4), (
            "max abs diff (bf16-matched ref): "
            f"{float(jnp.max(jnp.abs(out - ref_bf16)))}")
        # Loose sanity vs the full-f32 reference (bf16 weight-quant noise only).
        ref_f32 = time_embedding_ref(t, w1, b1, w2, b2)
        assert jnp.allclose(out, ref_f32, atol=5e-2, rtol=5e-2), (
            "max abs diff (f32 ref): "
            f"{float(jnp.max(jnp.abs(out - ref_f32)))}")

    root = jax.random.PRNGKey(0)
    keys = jax.random.split(root, 2)
    run_case(8, 128, keys[0])   # lane-aligned path (no padding)
    run_case(5, 96, keys[1])    # exercises batch->8 / dim->128 padding path
    print("KERNEL_OK")
</pallas_src>

<mosaic_0001>
module attributes {stable_mosaic.version = 11 : i64} {
  func.func @time_embedding_kernel(%arg0: i32, %arg1: memref<8x1xf32, #tpu.memory_space<vmem>>, %arg2: memref<1x128xf32, #tpu.memory_space<vmem>>, %arg3: memref<1x128xf32, #tpu.memory_space<vmem>>, %arg4: memref<1x128x128xbf16, #tpu.memory_space<vmem>>, %arg5: memref<1x128xf32, #tpu.memory_space<vmem>>, %arg6: memref<128x128xbf16, #tpu.memory_space<vmem>>, %arg7: memref<1x128xf32, #tpu.memory_space<vmem>>, %arg8: memref<8x128xf32, #tpu.memory_space<vmem>>, %arg9: memref<8x128xf32, #tpu.memory_space<vmem>>) attributes {dimension_semantics = [#tpu.dimension_semantics<arbitrary>], iteration_bounds = array<i64: 1>, scalar_prefetch = 0 : i64, scratch_operands = 1 : i64, tpu.core_type = #tpu.core_type<tc>, window_params = [{pipeline_mode = #tpu.pipeline_mode<synchronous>, transform_indices = @transform_0, window_bounds = array<i64: 8, 1>}, {pipeline_mode = #tpu.pipeline_mode<synchronous>, transform_indices = @transform_1, window_bounds = array<i64: 1, 128>}, {pipeline_mode = #tpu.pipeline_mode<synchronous>, transform_indices = @transform_2, window_bounds = array<i64: 1, 128>}, {transform_indices = @transform_3, window_bounds = array<i64: 1, 128, 128>}, {transform_indices = @transform_4, window_bounds = array<i64: 1, 128>}, {transform_indices = @transform_5, window_bounds = array<i64: 128, 128>}, {pipeline_mode = #tpu.pipeline_mode<synchronous>, transform_indices = @transform_6, window_bounds = array<i64: 1, 128>}, {pipeline_mode = #tpu.pipeline_mode<synchronous>, transform_indices = @transform_7, window_bounds = array<i64: 8, 128>}]} {
    %c0_i32 = arith.constant 0 : i32
    %0 = arith.cmpi eq, %arg0, %c0_i32 : i32
    %1 = arith.extui %0 : i1 to i32
    %c0_i32_0 = arith.constant 0 : i32
    %2 = arith.cmpi ne, %1, %c0_i32_0 : i32
    scf.if %2 {
      %c0_15 = arith.constant 0 : index
      %c0_16 = arith.constant 0 : index
      %23 = vector.load %arg1[%c0_15, %c0_16] : memref<8x1xf32, #tpu.memory_space<vmem>>, vector<8x1xf32>
      %c0_17 = arith.constant 0 : index
      %c0_18 = arith.constant 0 : index
      %24 = vector.load %arg2[%c0_17, %c0_18] : memref<1x128xf32, #tpu.memory_space<vmem>>, vector<1x128xf32>
      %25 = vector.broadcast %23 : vector<8x1xf32> to vector<8x128xf32>
      %26 = vector.broadcast %24 : vector<1x128xf32> to vector<8x128xf32>
      %27 = arith.mulf %25, %26 : vector<8x128xf32>
      %c0_19 = arith.constant 0 : index
      %c0_20 = arith.constant 0 : index
      %28 = vector.load %arg3[%c0_19, %c0_20] : memref<1x128xf32, #tpu.memory_space<vmem>>, vector<1x128xf32>
      %29 = vector.broadcast %28 : vector<1x128xf32> to vector<8x128xf32>
      %30 = arith.addf %27, %29 : vector<8x128xf32>
      %31 = math.sin %30 : vector<8x128xf32>
      %c0_21 = arith.constant 0 : index
      %c0_22 = arith.constant 0 : index
      %32 = vector.load %arg9[%c0_21, %c0_22] : memref<8x128xf32, #tpu.memory_space<vmem>>, vector<8x128xf32>
      tpu.vector_store %arg9[%c0_21, %c0_22], %31 {strides = array<i32>} : memref<8x128xf32, #tpu.memory_space<vmem>>, vector<8x128xf32>,
      %c0_23 = arith.constant 0 : index
      %c0_24 = arith.constant 0 : index
      %33 = vector.load %arg7[%c0_23, %c0_24] : memref<1x128xf32, #tpu.memory_space<vmem>>, vector<1x128xf32>
      %34 = vector.shape_cast %33 : vector<1x128xf32> to vector<1x128xf32>
      %35 = vector.broadcast %34 : vector<1x128xf32> to vector<8x128xf32>
      %c0_25 = arith.constant 0 : index
      %c0_26 = arith.constant 0 : index
      %36 = vector.load %arg8[%c0_25, %c0_26] : memref<8x128xf32, #tpu.memory_space<vmem>>, vector<8x128xf32>
      tpu.vector_store %arg8[%c0_25, %c0_26], %35 {strides = array<i32>} : memref<8x128xf32, #tpu.memory_space<vmem>>, vector<8x128xf32>,
    } else {
    }
    %c0 = arith.constant 0 : index
    %c0_1 = arith.constant 0 : index
    %c0_2 = arith.constant 0 : index
    %3 = vector.load %arg4[%c0, %c0_1, %c0_2] : memref<1x128x128xbf16, #tpu.memory_space<vmem>>, vector<1x128x128xbf16>
    %4 = vector.shape_cast %3 : vector<1x128x128xbf16> to vector<128x128xbf16>
    %5 = arith.extf %4 : vector<128x128xbf16> to vector<128x128xf32>
    %c0_3 = arith.constant 0 : index
    %c0_4 = arith.constant 0 : index
    %6 = vector.load %arg9[%c0_3, %c0_4] : memref<8x128xf32, #tpu.memory_space<vmem>>, vector<8x128xf32>
    %cst = arith.constant dense<0.000000e+00> : vector<8x128xf32>
    %7 = tpu.matmul %6, %5, %cst {dimension_numbers = #tpu.dot_dimension_numbers<[1], [0], [0], [1], [0, 0, 1, 1], [], []>} : vector<8x128xf32>, vector<128x128xf32>, vector<8x128xf32> -> vector<8x128xf32>
    %c0_5 = arith.constant 0 : index
    %c0_6 = arith.constant 0 : index
    %8 = vector.load %arg5[%c0_5, %c0_6] : memref<1x128xf32, #tpu.memory_space<vmem>>, vector<1x128xf32>
    %9 = vector.broadcast %8 : vector<1x128xf32> to vector<8x128xf32>
    %10 = arith.addf %7, %9 : vector<8x128xf32>
    %11 = arith.negf %10 : vector<8x128xf32>
    %12 = math.exp %11 : vector<8x128xf32>
    %cst_7 = arith.constant 1.000000e+00 : f32
    %13 = vector.broadcast %cst_7 : f32 to vector<8x128xf32>
    %14 = arith.addf %13, %12 : vector<8x128xf32>
    %15 = arith.divf %13, %14 : vector<8x128xf32>
    %16 = arith.mulf %10, %15 : vector<8x128xf32>
    %c0_8 = arith.constant 0 : index
    %c0_9 = arith.constant 0 : index
    %17 = vector.load %arg8[%c0_8, %c0_9] : memref<8x128xf32, #tpu.memory_space<vmem>>, vector<8x128xf32>
    %c0_10 = arith.constant 0 : index
    %c0_11 = arith.constant 0 : index
    %18 = vector.load %arg6[%c0_10, %c0_11] : memref<128x128xbf16, #tpu.memory_space<vmem>>, vector<128x128xbf16>
    %19 = arith.extf %18 : vector<128x128xbf16> to vector<128x128xf32>
    %cst_12 = arith.constant dense<0.000000e+00> : vector<8x128xf32>
    %20 = tpu.matmul %16, %19, %cst_12 {dimension_numbers = #tpu.dot_dimension_numbers<[1], [0], [0], [1], [0, 0, 1, 1], [], []>} : vector<8x128xf32>, vector<128x128xf32>, vector<8x128xf32> -> vector<8x128xf32>
    %21 = arith.addf %17, %20 : vector<8x128xf32>
    %c0_13 = arith.constant 0 : index
    %c0_14 = arith.constant 0 : index
    %22 = vector.load %arg8[%c0_13, %c0_14] : memref<8x128xf32, #tpu.memory_space<vmem>>, vector<8x128xf32>
    tpu.vector_store %arg8[%c0_13, %c0_14], %21 {strides = array<i32>} : memref<8x128xf32, #tpu.memory_space<vmem>>, vector<8x128xf32>,
    return
  }
  func.func @transform_0(%arg0: i32) -> (i32, i32) {
    %c0_i32 = arith.constant 0 : i32
    %c0_i32_0 = arith.constant 0 : i32
    %c0_i32_1 = arith.constant 0 : i32
    return %c0_i32, %c0_i32_0 : i32, i32
  }
  func.func @transform_1(%arg0: i32) -> (i32, i32) {
    %c0_i32 = arith.constant 0 : i32
    %c0_i32_0 = arith.constant 0 : i32
    %c0_i32_1 = arith.constant 0 : i32
    return %c0_i32, %c0_i32_0 : i32, i32
  }
  func.func @transform_2(%arg0: i32) -> (i32, i32) {
    %c0_i32 = arith.constant 0 : i32
    %c0_i32_0 = arith.constant 0 : i32
    %c0_i32_1 = arith.constant 0 : i32
    return %c0_i32, %c0_i32_0 : i32, i32
  }
  func.func @transform_3(%arg0: i32) -> (i32, i32, i32) {
    %c0_i32 = arith.constant 0 : i32
    %c0_i32_0 = arith.constant 0 : i32
    %c0_i32_1 = arith.constant 0 : i32
    return %arg0, %c0_i32, %c0_i32_0 : i32, i32, i32
  }
  func.func @transform_4(%arg0: i32) -> (i32, i32) {
    %c0_i32 = arith.constant 0 : i32
    %c0_i32_0 = arith.constant 0 : i32
    return %c0_i32, %arg0 : i32, i32
  }
  func.func @transform_5(%arg0: i32) -> (i32, i32) {
    %c0_i32 = arith.constant 0 : i32
    %c0_i32_0 = arith.constant 0 : i32
    return %arg0, %c0_i32 : i32, i32
  }
  func.func @transform_6(%arg0: i32) -> (i32, i32) {
    %c0_i32 = arith.constant 0 : i32
    %c0_i32_0 = arith.constant 0 : i32
    %c0_i32_1 = arith.constant 0 : i32
    return %c0_i32, %c0_i32_0 : i32, i32
  }
  func.func @transform_7(%arg0: i32) -> (i32, i32) {
    %c0_i32 = arith.constant 0 : i32
    %c0_i32_0 = arith.constant 0 : i32
    %c0_i32_1 = arith.constant 0 : i32
    return %c0_i32, %c0_i32_0 : i32, i32
  }
}

</mosaic_0001>

<llo_original>
// kernel: tpu_custom_call.1
$region0: #{tpu_custom_call.1}
  #allocation0 [shape = 'u32[]', space=smem, size = 0x4, offset = 0x4, fixed_abs, tag = 'smem constant byte address 0x4 - core index']
  #allocation1 [shape = 'u32[72,128]{1,0:T(1,128)}', space=vmem, size = 0x9000, scoped, tag = 'internal scratch']
  #allocation2 [shape = 'f32[8,128]{1,0:T(8,128)}', space=vmem, size = 0x1000, scoped, tag = 'scratch operand']
  %s0 = inlined_call_operand.vmem [shape: f32[8,1], index: 0, kind: input, shape index: {}]
  %s1 = inlined_call_operand.vmem [shape: f32[1,128], index: 1, kind: input, shape index: {}]
  %s2 = inlined_call_operand.vmem [shape: f32[1,128], index: 2, kind: input, shape index: {}]
  %s3 = inlined_call_operand.hbm [shape: bf16[1,128,128], index: 3, kind: input, shape index: {}]
  %s4 = inlined_call_operand.vmem [shape: f32[1,128], index: 4, kind: input, shape index: {}]
  %s5 = inlined_call_operand.hbm [shape: bf16[128,128], index: 5, kind: input, shape index: {}]
  %s6 = inlined_call_operand.vmem [shape: f32[1,128], index: 6, kind: input, shape index: {}]
  %s7 = inlined_call_operand.hbm [shape: f32[8,128], index: 7, kind: output, shape index: {}]
  %s8 = sld [smem:[#allocation0]]
  $region50: #{tpu_custom_call.1} parent=0
    _
  %s10 = ssub.s32 1, %s8
  %s11 = scalar_select 0, %s10, %s8
  $region1: #{tpu_custom_call.1} parent=0
    #allocation3 [shape = 'u8[32768]{0}', space=vmem, size = 0x8000, scoped, tag = 'input window, operand 3, single buffered']
    #allocation4 [shape = 's32[1]{0}', space=sflag, size = 0x4, scoped, tag = 'scoped memory for tpu_custom_call.1']
    #allocation5 [shape = 's32[1]{0}', space=sflag, size = 0x4, scoped, tag = 'scoped memory for tpu_custom_call.1']
    #allocation6 [shape = 'u8[32768]{0}', space=vmem, size = 0x8000, scoped, tag = 'input window, operand 5, single buffered']
    #allocation7 [shape = 's32[1]{0}', space=sflag, size = 0x4, scoped, tag = 'scoped memory for tpu_custom_call.1']
    #allocation8 [shape = 'u8[4096]{0}', space=vmem, size = 0x1000, scoped, tag = 'output window, operand 0, single buffered']
    %12 = vsyncpa [#allocation4], 0
    %13 = vsyncpa [#allocation7], 0
    %14 = vsyncpa [#allocation5], 0
    // Predicated region
    $region2: #{tpu_custom_call.1} parent=1 // pred_check
      _
    $region3: #{tpu_custom_call.1} parent=1 // pred_check_branch
      %16 = sbr.rel (0) target = $region5
    $region4: #{tpu_custom_call.1} parent=1 // pred_region
      _
    $region5: #{tpu_custom_call.1} parent=1 // pred_fallthru
      _
    // Predicated region
    $region6: #{tpu_custom_call.1} parent=1 // pred_check
      _
    $region7: #{tpu_custom_call.1} parent=1 // pred_check_branch
      %18 = sbr.rel (0) target = $region9
    $region8: #{tpu_custom_call.1} parent=1 // pred_region
      _
    $region9: #{tpu_custom_call.1} parent=1 // pred_fallthru
      _
    // Predicated region
    $region10: #{tpu_custom_call.1} parent=1 // pred_check
      _
    $region11: #{tpu_custom_call.1} parent=1 // pred_check_branch
      %20 = sbr.rel (0) target = $region13
    $region12: #{tpu_custom_call.1} parent=1 // pred_region
      _
    $region13: #{tpu_custom_call.1} parent=1 // pred_fallthru
      _
    // Predicated region
    $region14: #{tpu_custom_call.1} parent=1 // pred_check
      _
    $region15: #{tpu_custom_call.1} parent=1 // pred_check_branch
      %22 = sbr.rel (0) target = $region17
    $region16: #{tpu_custom_call.1} parent=1 // pred_region
      %24 = vsyncadd [#allocation4], 0
      %s25 = sshll.u32 %s3, 4
      %s26 = int_to_ptr.hbm [resolvable:$true] %s25
      %s27 = sshll.u32 [#allocation3], 4
      %s28 = int_to_ptr.vmem [resolvable:$true] %s27
      %33 = dma.hbm_to_vmem [thread:$0]  %s26, 1024, %s28, [#allocation4], 64, 64, 4
    $region17: #{tpu_custom_call.1} parent=1 // pred_fallthru
      _
    // Predicated region
    $region18: #{tpu_custom_call.1} parent=1 // pred_check
      _
    $region19: #{tpu_custom_call.1} parent=1 // pred_check_branch
      %35 = sbr.rel (0) target = $region21
    $region20: #{tpu_custom_call.1} parent=1 // pred_region
      _
    $region21: #{tpu_custom_call.1} parent=1 // pred_fallthru
      _
    // Predicated region
    $region22: #{tpu_custom_call.1} parent=1 // pred_check
      _
    $region23: #{tpu_custom_call.1} parent=1 // pred_check_branch
      %37 = sbr.rel (0) target = $region25
    $region24: #{tpu_custom_call.1} parent=1 // pred_region
      %39 = vsyncadd [#allocation7], 0
      %s40 = sshll.u32 %s5, 4
      %s41 = int_to_ptr.hbm [resolvable:$true] %s40
      %s42 = sshll.u32 [#allocation6], 4
      %s43 = int_to_ptr.vmem [resolvable:$true] %s42
      %48 = dma.hbm_to_vmem [thread:$0]  %s41, 1024, %s43, [#allocation7], 64, 64, 4
    $region25: #{tpu_custom_call.1} parent=1 // pred_fallthru
      _
    // Predicated region
    $region26: #{tpu_custom_call.1} parent=1 // pred_check
      _
    $region27: #{tpu_custom_call.1} parent=1 // pred_check_branch
      %50 = sbr.rel (0) target = $region29
    $region28: #{tpu_custom_call.1} parent=1 // pred_region
      _
    $region29: #{tpu_custom_call.1} parent=1 // pred_fallthru
      _
    // Predicated region
    $region30: #{tpu_custom_call.1} parent=1 // pred_check
      _
    $region31: #{tpu_custom_call.1} parent=1 // pred_check_branch
      %52 = sbr.rel (0) target = $region33
    $region32: #{tpu_custom_call.1} parent=1 // pred_region
      %54 = dma.done [#allocation4], 1024
    $region33: #{tpu_custom_call.1} parent=1 // pred_fallthru
      _
    // Predicated region
    $region34: #{tpu_custom_call.1} parent=1 // pred_check
      _
    $region35: #{tpu_custom_call.1} parent=1 // pred_check_branch
      %56 = sbr.rel (0) target = $region37
    $region36: #{tpu_custom_call.1} parent=1 // pred_region
      %58 = dma.done [#allocation7], 1024
    $region37: #{tpu_custom_call.1} parent=1 // pred_fallthru
      _
    %p59 = scmp.eq.s32.totalorder 0, 0
    // Predicated region
    $region38: #{tpu_custom_call.1} parent=1 // pred_check
      %p60 = pneg %p59
    $region39: #{tpu_custom_call.1} parent=1 // pred_check_branch
      %62 = sbr.rel (%p60) target = $region41
    $region40: #{tpu_custom_call.1} parent=1 // pred_region
      %v63 = vld [vmem:[%s0] sm:$0xff]
      %v64 = vld [vmem:[%s1] sm:$0x1]
      %66 = vset.pattern.permute.xlu0 0
      %67 = vperm.xlu0 %66, %v63
      %v68 = vpop.permute.xlu0 %67
      %v71 = vperm.slane %v64, 0
      %v73 = vmul.f32 %v68, %v71
      %v74 = vld [vmem:[%s2] sm:$0x1]
      %v76 = vperm.slane %v74, 0
      %v78 = vadd.f32 %v73, %v76
      %v79 = vand.u32 2147483647, %v78
      %vm80 = vcmp.le.f32.partialorder %v79, 0.7853982
      %vm81 = vcmp.lt.s32.totalorder %v78, 0
      %v82 = vand.u32 %v78, 2139095040
      %v83 = vshrl.u32 %v82, 23
      %v84 = vsub.s32 %v83, 127
      %v85 = vand.u32 2147483647, %v78
      %v86 = vand.u32 %v85, 8388607
      %v87 = vor.u32 %v86, 8388608
      %v88 = vsub.s32 0, %v87
      %v89 = vadd.s32 %v84, 1
      %vm90 = vcmp.gt.s32.totalorder %v89, 0
      %v91 = vsel %vm90, %v89, 0
      %v92 = vshrl.u32 %v91, 5
      %v93 = vand.u32 %v91, 31
      %v94 = vsub.s32 32, %v93
      %v95 = vshrl.u32 683565275, %v94
      %v96 = vshll.u32 683565275, %v93
      %v97 = vshrl.u32 2475754826, %v94
      %v98 = vor.u32 %v96, %v97
      %v99 = vshll.u32 2475754826, %v93
      %v100 = vshrl.u32 2131351028, %v94
      %v101 = vor.u32 %v99, %v100
      %v102 = vshll.u32 2131351028, %v93
      %v103 = vshrl.u32 2102212464, %v94
      %v104 = vor.u32 %v102, %v103
      %v105 = vshll.u32 2102212464, %v93
      %v106 = vshrl.u32 920167782, %v94
      %v107 = vor.u32 %v105, %v106
      %v108 = vshll.u32 920167782, %v93
      %v109 = vshrl.u32 1326507024, %v94
      %v110 = vor.u32 %v108, %v109
      %vm111 = vcmp.lt.s32.totalorder %v92, 1
      %vm112 = vcmp.lt.s32.totalorder %v92, 2
      %vm113 = vcmp.lt.s32.totalorder %v92, 3
      %vm114 = vcmp.lt.s32.totalorder %v92, 4
      %v115 = vsel %vm111, %v95, %v98
      %v116 = vsel %vm114, %v104, 2102212464
      %v117 = vsel %vm113, %v101, %v116
      %v118 = vsel %vm112, %v115, %v117
      %v119 = vsel %vm111, %v98, %v101
      %v120 = vsel %vm114, %v107, 920167782
      %v121 = vsel %vm113, %v104, %v120
      %v122 = vsel %vm112, %v119, %v121
      %v123 = vsel %vm111, %v101, %v104
      %v124 = vsel %vm114, %v110, 1326507024
      %v125 = vsel %vm113, %v107, %v124
      %v126 = vsel %vm112, %v123, %v125
      %v127 = vshll.u32 %v87, 8
      %v128 = vand.u32 %v127, 65535
      %v129 = vshrl.u32 %v127, 16
      %v130 = vand.u32 %v126, 65535
      %v131 = vshrl.u32 %v126, 16
      %v132 = vmul.u32 %v128, %v130
      %v133 = vmul.u32 %v128, %v131
      %v134 = vmul.u32 %v129, %v130
      %v135 = vmul.u32 %v129, %v131
      %v136 = vshll.u32 %v133, 16
      %v137 = vshrl.u32 %v133, 16
      %v138 = vshll.u32 %v134, 16
      %v139 = vshrl.u32 %v134, 16
      %vm140 = vc.u32 %v132, %v136
      %v141 = vsel %vm140, 1, 0
      %v142 = vadd.s32 %v132, %v136
      %v143 = vadd.s32 %v135, %v141
      %vm144 = vc.u32 %v142, %v138
      %v145 = vsel %vm144, 1, 0
      %v146 = vadd.s32 %v142, %v138
      %v147 = vadd.s32 %v143, %v145
      %v148 = vadd.s32 %v147, %v137
      %v149 = vadd.s32 %v148, %v139
      %v150 = vand.u32 %v127, 65535
      %v151 = vshrl.u32 %v127, 16
      %v152 = vand.u32 %v122, 65535
      %v153 = vshrl.u32 %v122, 16
      %v154 = vmul.u32 %v150, %v152
      %v155 = vmul.u32 %v150, %v153
      %v156 = vmul.u32 %v151, %v152
      %v157 = vmul.u32 %v151, %v153
      %v158 = vshll.u32 %v155, 16
      %v159 = vshrl.u32 %v155, 16
      %v160 = vshll.u32 %v156, 16
      %v161 = vshrl.u32 %v156, 16
      %vm162 = vc.u32 %v154, %v158
      %v163 = vsel %vm162, 1, 0
      %v164 = vadd.s32 %v154, %v158
      %v165 = vadd.s32 %v157, %v163
      %vm166 = vc.u32 %v164, %v160
      %v167 = vsel %vm166, 1, 0
      %v168 = vadd.s32 %v164, %v160
      %v169 = vadd.s32 %v165, %v167
      %v170 = vadd.s32 %v169, %v159
      %v171 = vadd.s32 %v170, %v161
      %v172 = vmul.u32 %v127, %v118
      %v173 = vadd.s32 %v149, %v168
      %vm174 = vc.u32 %v149, %v168
      %v175 = vadd.s32 %v171, 1
      %v176 = vsel %vm174, %v175, %v171
      %v177 = vadd.s32 %v172, %v176
      %v178 = vadd.s32 %v177, 536870912
      %v179 = vshrl.u32 %v178, 30
      %v180 = vshll.u32 %v179, 30
      %v181 = vsub.s32 %v177, %v180
      %vm182 = vcmp.lt.s32.totalorder %v181, 0
      %v183 = vsub.s32 0, %v181
      %v184 = vsel %vm182, %v183, %v181
      %v185 = vclz %v184
      %v186 = vsub.s32 %v185, 2
      %vm187 = vcmp.gt.s32.totalorder 0, %v186
      %v188 = vsel %vm187, 0, %v186
      %v189 = vsub.s32 32, %v188
      %v190 = vshll.u32 %v181, %v188
      %v191 = vshrl.u32 %v173, %v189
      %v192 = vor.u32 %v190, %v191
      %v193 = vsub.s32 4294967266, %v188
      %v194 = vadd.s32 %v193, 127
      %v195 = vshll.u32 %v194, 23
      %v196 = vor.u32 4788187, %v195
      %v197 = vand.u32 2147483647, %v196
      %v199 = vcvt.s32.f32 %v192
      %v200 = vmul.f32 %v199, %v197
      %v201 = vxor.u32 %v200, 2147483648
      %v202 = vsel %vm81, %v201, %v200
      %v203 = vsub.s32 4, %v179
      %v204 = vsel %vm81, %v203, %v179
      %v205 = vsel %vm80, %v78, %v202
      %v206 = vsel %vm80, 0, %v204
      %v207 = vmul.f32 %v205, %v205
      %v208 = vmul.f32 %v207, -0.001358992
      %v209 = vadd.f32 %v208, 0.041655596
      %v210 = vmul.f32 %v207, %v209
      %v211 = vadd.f32 %v210, -0.4999988
      %v212 = vmul.f32 %v207, %v211
      %v213 = vadd.f32 1.0, %v212
      %v214 = vmul.f32 %v205, %v205
      %v215 = vmul.f32 %v214, -0.00019511016
      %v216 = vadd.f32 %v215, 0.008332121
      %v217 = vmul.f32 %v214, %v216
      %v218 = vadd.f32 %v217, -0.16666654
      %v219 = vmul.f32 %v214, %v218
      %v220 = vadd.f32 %v219, 1.0
      %v221 = vmul.f32 %v220, %v205
      %vm222 = vweird.f32 %v78
      %v223 = vadd.s32 %v206, 3
      %v224 = vand.u32 %v223, 3
      %vm225 = vcmp.lt.s32.totalorder %v224, 2
      %vm226 = vcmp.eq.s32.totalorder %v224, 0
      %v227 = vxor.u32 %v221, 2147483648
      %v228 = vsel %vm226, %v213, %v227
      %vm229 = vcmp.eq.s32.totalorder %v224, 2
      %v230 = vxor.u32 %v213, 2147483648
      %v231 = vsel %vm229, %v230, %v221
      %v232 = vsel %vm225, %v228, %v231
      %v233 = vsel %vm222, nan, %v232
      %234 = vst [vmem:[#allocation2] sm:$0xff] %v233
      %v235 = vld [vmem:[%s6] sm:$0x1]
      %v237 = vperm.slane %v235, 0
      %239 = vst [vmem:[#allocation8] sm:$0xff] %v237
    $region41: #{tpu_custom_call.1} parent=1 // pred_fallthru
      _
    %v240 = vld [vmem:[#allocation3] sm:$0xf]
    %v241 = vld [vmem:[#allocation3 + $0x4] sm:$0xf]
    %v242 = vld [vmem:[#allocation3 + $0x8] sm:$0xf]
    %v243 = vld [vmem:[#allocation3 + $0xc] sm:$0xf]
    %v244 = vld [vmem:[#allocation3 + $0x10] sm:$0xf]
    %v245 = vld [vmem:[#allocation3 + $0x14] sm:$0xf]
    %v246 = vld [vmem:[#allocation3 + $0x18] sm:$0xf]
    %v247 = vld [vmem:[#allocation3 + $0x1c] sm:$0xf]
    %v248 = vld [vmem:[#allocation3 + $0x20] sm:$0xf]
    %v249 = vld [vmem:[#allocation3 + $0x24] sm:$0xf]
    %v250 = vld [vmem:[#allocation3 + $0x28] sm:$0xf]
    %v251 = vld [vmem:[#allocation3 + $0x2c] sm:$0xf]
    %v252 = vld [vmem:[#allocation3 + $0x30] sm:$0xf]
    %v253 = vld [vmem:[#allocation3 + $0x34] sm:$0xf]
    %v254 = vld [vmem:[#allocation3 + $0x38] sm:$0xf]
    %v255 = vld [vmem:[#allocation3 + $0x3c] sm:$0xf]
    %v256 = vunpack.c.l.bf16 %v240
    %v257 = vunpack.c.l.bf16 %v241
    %v258 = vunpack.c.l.bf16 %v242
    %v259 = vunpack.c.l.bf16 %v243
    %v260 = vunpack.c.l.bf16 %v244
    %v261 = vunpack.c.l.bf16 %v245
    %v262 = vunpack.c.l.bf16 %v246
    %v263 = vunpack.c.l.bf16 %v247
    %v264 = vunpack.c.l.bf16 %v248
    %v265 = vunpack.c.l.bf16 %v249
    %v266 = vunpack.c.l.bf16 %v250
    %v267 = vunpack.c.l.bf16 %v251
    %v268 = vunpack.c.l.bf16 %v252
    %v269 = vunpack.c.l.bf16 %v253
    %v270 = vunpack.c.l.bf16 %v254
    %v271 = vunpack.c.l.bf16 %v255
    %v272 = vld [vmem:[#allocation2] sm:$0xff]
    %v273 = vld [vmem:[%s4] sm:$0x1]
    %v275 = vperm.slane %v273, 0
    %277 = vmatpush.msra.mxu0 %v271
    %278 = vmatpush.msra.mxu0 %v270
    %279 = vmatpush.msra.mxu0 %v269
    %280 = vmatpush.msra.mxu0 %v268
    %281 = vmatpush.msra.mxu0 %v267
    %282 = vmatpush.msra.mxu0 %v266
    %283 = vmatpush.msra.mxu0 %v265
    %284 = vmatpush.msra.mxu0 %v264
    %285 = vmatpush.msra.mxu0 %v263
    %286 = vmatpush.msra.mxu0 %v262
    %287 = vmatpush.msra.mxu0 %v261
    %288 = vmatpush.msra.mxu0 %v260
    %289 = vmatpush.msra.mxu0 %v259
    %290 = vmatpush.msra.mxu0 %v258
    %291 = vmatpush.msra.mxu0 %v257
    %292 = vmatpush.msra.mxu0 %v256
    %293 = vmatmul.f32.gmra.mxu0 %v272
    %v294 = vpop.f32.mrf.mxu0
    %v295 = vadd.f32 %v275, %v294
    %296 = vdwg.mxu0
    %v297 = vxor.u32 %v295, 2147483648
    %v298 = vmul.f32 %v297, 1.442695
    %v299 = vpow.pop %v298
    %v300 = vadd.f32 %v299, 1.0
    %v301 = vrcp.pop %v300
    %v302 = vmul.f32 %v300, %v301
    %v303 = vsub.f32 1.0, %v302
    %v304 = vmul.f32 %v301, %v303
    %v305 = vadd.f32 %v301, %v304
    %vm306 = vweird.f32 %v300
    %vm307 = vweird.f32 %v301
    %vm308 = vmor %vm306, %vm307
    %v309 = vsel %vm308, %v301, %v305
    %v310 = vand.u32 2147483647, %v300
    %vm311 = vcmp.eq.f32.partialorder %v310, 8.507059e+37
    %v312 = vand.u32 %v300, 2147483648
    %v313 = vor.u32 1.1754944e-38, %v312
    %v314 = vsel %vm311, %v313, %v309
    %v315 = vmul.f32 1.0, %v314
    %v316 = vmul.f32 %v295, %v315
    %v317 = vld [vmem:[#allocation8] sm:$0xff]
    %v318 = vld [vmem:[#allocation6] sm:$0xf]
    %v319 = vld [vmem:[#allocation6 + $0x4] sm:$0xf]
    %v320 = vld [vmem:[#allocation6 + $0x8] sm:$0xf]
    %v321 = vld [vmem:[#allocation6 + $0xc] sm:$0xf]
    %v322 = vld [vmem:[#allocation6 + $0x10] sm:$0xf]
    %v323 = vld [vmem:[#allocation6 + $0x14] sm:$0xf]
    %v324 = vld [vmem:[#allocation6 + $0x18] sm:$0xf]
    %v325 = vld [vmem:[#allocation6 + $0x1c] sm:$0xf]
    %v326 = vld [vmem:[#allocation6 + $0x20] sm:$0xf]
    %v327 = vld [vmem:[#allocation6 + $0x24] sm:$0xf]
    %v328 = vld [vmem:[#allocation6 + $0x28] sm:$0xf]
    %v329 = vld [vmem:[#allocation6 + $0x2c] sm:$0xf]
    %v330 = vld [vmem:[#allocation6 + $0x30] sm:$0xf]
    %v331 = vld [vmem:[#allocation6 + $0x34] sm:$0xf]
    %v332 = vld [vmem:[#allocation6 + $0x38] sm:$0xf]
    %v333 = vld [vmem:[#allocation6 + $0x3c] sm:$0xf]
    %v334 = vunpack.c.l.bf16 %v318
    %v335 = vunpack.c.l.bf16 %v319
    %v336 = vunpack.c.l.bf16 %v320
    %v337 = vunpack.c.l.bf16 %v321
    %v338 = vunpack.c.l.bf16 %v322
    %v339 = vunpack.c.l.bf16 %v323
    %v340 = vunpack.c.l.bf16 %v324
    %v341 = vunpack.c.l.bf16 %v325
    %v342 = vunpack.c.l.bf16 %v326
    %v343 = vunpack.c.l.bf16 %v327
    %v344 = vunpack.c.l.bf16 %v328
    %v345 = vunpack.c.l.bf16 %v329
    %v346 = vunpack.c.l.bf16 %v330
    %v347 = vunpack.c.l.bf16 %v331
    %v348 = vunpack.c.l.bf16 %v332
    %v349 = vunpack.c.l.bf16 %v333
    %350 = vmatpush.msra.mxu0 %v349
    %351 = vmatpush.msra.mxu0 %v348
    %352 = vmatpush.msra.mxu0 %v347
    %353 = vmatpush.msra.mxu0 %v346
    %354 = vmatpush.msra.mxu0 %v345
    %355 = vmatpush.msra.mxu0 %v344
    %356 = vmatpush.msra.mxu0 %v343
    %357 = vmatpush.msra.mxu0 %v342
    %358 = vmatpush.msra.mxu0 %v341
    %359 = vmatpush.msra.mxu0 %v340
    %360 = vmatpush.msra.mxu0 %v339
    %361 = vmatpush.msra.mxu0 %v338
    %362 = vmatpush.msra.mxu0 %v337
    %363 = vmatpush.msra.mxu0 %v336
    %364 = vmatpush.msra.mxu0 %v335
    %365 = vmatpush.msra.mxu0 %v334
    %366 = vmatmul.f32.gmra.mxu0 %v316
    %v367 = vpop.f32.mrf.mxu0
    %v368 = vadd.f32 0.0, %v367
    %369 = vdwg.mxu0
    %v370 = vadd.f32 %v317, %v368
    %371 = vst [vmem:[#allocation8] sm:$0xff] %v370
    // Predicated region
    $region42: #{tpu_custom_call.1} parent=1 // pred_check
      _
    $region43: #{tpu_custom_call.1} parent=1 // pred_check_branch
      %373 = sbr.rel (0) target = $region45
    $region44: #{tpu_custom_call.1} parent=1 // pred_region
      %375 = vsyncadd [#allocation5], 0
      %s377 = sshll.u32 [#allocation8], 4
      %s378 = int_to_ptr.vmem [resolvable:$true] %s377
      %s379 = sshll.u32 %s7, 4
      %s380 = int_to_ptr.hbm [resolvable:$true] %s379
      %382 = dma.vmem_to_hbm [thread:$0]  %s378, 128, %s380, [#allocation5]
    $region45: #{tpu_custom_call.1} parent=1 // pred_fallthru
      _
    // Predicated region
    $region46: #{tpu_custom_call.1} parent=1 // pred_check
      _
    $region47: #{tpu_custom_call.1} parent=1 // pred_check_branch
      %384 = sbr.rel (0) target = $region49
    $region48: #{tpu_custom_call.1} parent=1 // pred_region
      %386 = dma.done [#allocation5], 128
    $region49: #{tpu_custom_call.1} parent=1 // pred_fallthru
      _
    %387 = vsyncpa [#allocation4], 1
    %388 = vsyncpa [#allocation7], 1
    %389 = vsyncpa [#allocation5], 1

</llo_original>
